<compile_context>
chip_gen: v7x
topology: tpu7x:2x2x1
jax: 0.10.0
libtpu: 0.0.40
codegen_flags: <defaults>
</compile_context>

<pallas_src>
import jax
import jax.numpy as jnp
from jax.experimental import pallas as pl
from jax.experimental.pallas import tpu as pltpu


IN_FEATURES = 784
OUT_FEATURES = 10
N_PAD = 128                 # weight lane-padded to one lane tile (VMEM only)
MAX_TILE_M = 2048           # per-step bf16 x tile ~3.1 MiB (x2 buffers)
SMALL_BATCH_CUTOFF = 128    # below this, plain XLA dot wins


def _round_up(v, m):
    return ((v + m - 1) // m) * m


def _pick_tile_m(m):
    # >= 2 grid steps whenever possible (v7x: both TCs / both HBM paths),
    # multiple of 16 for bf16 sublane packing, capped for scoped VMEM.
    tile = _round_up(pl.cdiv(m, 2), 16)
    return max(16, min(MAX_TILE_M, tile))


def _linear_kernel(x_ref, w_ref, b_ref, o_ref):
    # x_ref: (tile_m, 784) bf16   w_ref: (784, 128) bf16
    # b_ref: (1, 128) f32         o_ref: (tile_m, 10) f32
    acc = jnp.dot(x_ref[...], w_ref[...], preferred_element_type=jnp.float32)
    o_ref[...] = (acc + b_ref[...])[:, :OUT_FEATURES].astype(o_ref.dtype)


def pallas_linear(x, w_padded, b_padded):
    """(x @ w_padded + b_padded)[:, :10]; x is [M, 784]."""
    M = x.shape[0]
    x = x.astype(jnp.bfloat16)          # halves the dominant HBM read
    tile_m = _pick_tile_m(M)
    grid = (pl.cdiv(M, tile_m),)        # no jnp.pad; Pallas clips last block

    return pl.pallas_call(
        _linear_kernel,
        out_shape=jax.ShapeDtypeStruct((M, OUT_FEATURES), jnp.float32),
        grid_spec=pltpu.PrefetchScalarGridSpec(
            num_scalar_prefetch=0,
            grid=grid,
            in_specs=[
                pl.BlockSpec((tile_m, IN_FEATURES), lambda i: (i, 0)),
                pl.BlockSpec((IN_FEATURES, N_PAD), lambda i: (0, 0)),  # W resident
                pl.BlockSpec((1, N_PAD), lambda i: (0, 0)),            # bias resident
            ],
            out_specs=pl.BlockSpec((tile_m, OUT_FEATURES), lambda i: (i, 0)),
        ),
        compiler_params=pltpu.CompilerParams(
            dimension_semantics=("parallel",),
        ),
    )(x, w_padded, b_padded)


class MnistLogisticPallas:
    """Mirror of the PyTorch MnistLogistic module (Linear(784, 10))."""

    def __init__(self, key):
        k_w, k_b = jax.random.split(key)
        bound = 1.0 / jnp.sqrt(jnp.float32(IN_FEATURES))
        # PyTorch-layout parameters: weight [out, in], bias [out].
        self.weight = jax.random.uniform(
            k_w, (OUT_FEATURES, IN_FEATURES), jnp.float32, -bound, bound)
        self.bias = jax.random.uniform(
            k_b, (OUT_FEATURES,), jnp.float32, -bound, bound)
        # One-time kernel-layout parameters: transposed, lane-padded, bf16.
        self.w_padded = jnp.zeros((IN_FEATURES, N_PAD), jnp.bfloat16).at[
            :, :OUT_FEATURES].set(self.weight.T.astype(jnp.bfloat16))
        self.b_padded = jnp.zeros((1, N_PAD), jnp.float32).at[
            0, :OUT_FEATURES].set(self.bias)

    def __call__(self, xb):
        xb = xb.astype(jnp.float32)
        if xb.shape[0] <= SMALL_BATCH_CUTOFF:
            # Overhead-bound regime: a fused XLA dot is as fast or faster.
            return xb @ self.weight.T + self.bias
        return pallas_linear(xb, self.w_padded, self.b_padded)


if __name__ == "__main__":
    key = jax.random.PRNGKey(0)
    k_model, k_x = jax.random.split(key)

    model = MnistLogisticPallas(k_model)

    # Pallas path: batch above the small-batch cutoff, deliberately NOT
    # tile-aligned so the ragged final block is exercised, and >= 2 grid
    # steps so the "parallel" axis can shard across v7x's two TensorCores.
    B = 200
    x = jax.random.normal(k_x, (B, IN_FEATURES), dtype=jnp.float32)
    y = jax.block_until_ready(model(x))

    # Reference: plain f32 JAX linear with the same PyTorch-layout params.
    y_ref = x @ model.weight.T + model.bias

    assert y.shape == (B, OUT_FEATURES), y.shape
    assert y.dtype == jnp.float32
    # bf16 inputs with f32 accumulation over a 784-deep contraction.
    assert jnp.allclose(y, y_ref, atol=5e-2, rtol=5e-2), float(
        jnp.max(jnp.abs(y - y_ref)))

    # Tiny-batch path (XLA fallback) keeps identical forward semantics.
    x_small = x[:8]
    y_small = jax.block_until_ready(model(x_small))
    assert y_small.shape == (8, OUT_FEATURES)
    assert jnp.allclose(y_small, y_ref[:8], atol=1e-4, rtol=1e-4)

    print("KERNEL_OK")
</pallas_src>

<mosaic_0001>
module attributes {stable_mosaic.version = 11 : i64} {
  func.func @_linear_kernel(%arg0: i32, %arg1: memref<112x784xbf16, #tpu.memory_space<vmem>>, %arg2: memref<784x128xbf16, #tpu.memory_space<vmem>>, %arg3: memref<1x128xf32, #tpu.memory_space<vmem>>, %arg4: memref<112x10xf32, #tpu.memory_space<vmem>>) attributes {dimension_semantics = [#tpu.dimension_semantics<parallel>], iteration_bounds = array<i64: 2>, scalar_prefetch = 0 : i64, scratch_operands = 0 : i64, tpu.core_type = #tpu.core_type<tc>, window_params = [{transform_indices = @transform_0, window_bounds = array<i64: 112, 784>}, {pipeline_mode = #tpu.pipeline_mode<synchronous>, transform_indices = @transform_1, window_bounds = array<i64: 784, 128>}, {pipeline_mode = #tpu.pipeline_mode<synchronous>, transform_indices = @transform_2, window_bounds = array<i64: 1, 128>}, {transform_indices = @transform_3, window_bounds = array<i64: 112, 10>}]} {
    %c0 = arith.constant 0 : index
    %c0_0 = arith.constant 0 : index
    %0 = vector.load %arg1[%c0, %c0_0] : memref<112x784xbf16, #tpu.memory_space<vmem>>, vector<112x784xbf16>
    %c0_1 = arith.constant 0 : index
    %c0_2 = arith.constant 0 : index
    %1 = vector.load %arg2[%c0_1, %c0_2] : memref<784x128xbf16, #tpu.memory_space<vmem>>, vector<784x128xbf16>
    %cst = arith.constant dense<0.000000e+00> : vector<112x128xf32>
    %2 = tpu.matmul %0, %1, %cst {dimension_numbers = #tpu.dot_dimension_numbers<[1], [0], [0], [1], [0, 0, 1, 1], [], []>} : vector<112x784xbf16>, vector<784x128xbf16>, vector<112x128xf32> -> vector<112x128xf32>
    %c0_3 = arith.constant 0 : index
    %c0_4 = arith.constant 0 : index
    %3 = vector.load %arg3[%c0_3, %c0_4] : memref<1x128xf32, #tpu.memory_space<vmem>>, vector<1x128xf32>
    %4 = vector.broadcast %3 : vector<1x128xf32> to vector<112x128xf32>
    %5 = arith.addf %2, %4 : vector<112x128xf32>
    %6 = vector.extract_strided_slice %5 {offsets = [0, 0], sizes = [112, 10], strides = [1, 1]} : vector<112x128xf32> to vector<112x10xf32>
    %c0_5 = arith.constant 0 : index
    %c0_6 = arith.constant 0 : index
    %7 = vector.load %arg4[%c0_5, %c0_6] : memref<112x10xf32, #tpu.memory_space<vmem>>, vector<112x10xf32>
    tpu.vector_store %arg4[%c0_5, %c0_6], %6 {strides = array<i32>} : memref<112x10xf32, #tpu.memory_space<vmem>>, vector<112x10xf32>,
    return
  }
  func.func @transform_0(%arg0: i32) -> (i32, i32) {
    %c0_i32 = arith.constant 0 : i32
    %c0_i32_0 = arith.constant 0 : i32
    return %arg0, %c0_i32 : i32, i32
  }
  func.func @transform_1(%arg0: i32) -> (i32, i32) {
    %c0_i32 = arith.constant 0 : i32
    %c0_i32_0 = arith.constant 0 : i32
    %c0_i32_1 = arith.constant 0 : i32
    return %c0_i32, %c0_i32_0 : i32, i32
  }
  func.func @transform_2(%arg0: i32) -> (i32, i32) {
    %c0_i32 = arith.constant 0 : i32
    %c0_i32_0 = arith.constant 0 : i32
    %c0_i32_1 = arith.constant 0 : i32
    return %c0_i32, %c0_i32_0 : i32, i32
  }
  func.func @transform_3(%arg0: i32) -> (i32, i32) {
    %c0_i32 = arith.constant 0 : i32
    %c0_i32_0 = arith.constant 0 : i32
    return %arg0, %c0_i32 : i32, i32
  }
}

</mosaic_0001>

<llo_original>
// kernel: tpu_custom_call.1
$region0: #{tpu_custom_call.1}
  #allocation0 [shape = 'u32[]', space=smem, size = 0x4, offset = 0x4, fixed_abs, tag = 'smem constant byte address 0x4 - core index']
  #allocation1 [shape = 'u32[144,128]{1,0:T(1,128)}', space=vmem, size = 0x12000, scoped, tag = 'internal scratch']
  %s0 = inlined_call_operand.hbm [shape: bf16[200,784], index: 0, kind: input, shape index: {}]
  %s1 = inlined_call_operand.hbm [shape: bf16[784,128], index: 1, kind: input, shape index: {}]
  %s2 = inlined_call_operand.vmem [shape: f32[1,128], index: 2, kind: input, shape index: {}]
  %s3 = inlined_call_operand.vmem [shape: f32[200,10], index: 3, kind: output, shape index: {}]
  %s4 = sld [smem:[#allocation0]]
  $region101: #{tpu_custom_call.1} parent=0
    _
  %s6 = ssub.s32 1, %s4
  %s7 = scalar_select 0, %s6, %s4
  $region1: #{tpu_custom_call.1} parent=0
    #allocation2 [shape = 'u8[401408]{0}', space=vmem, size = 0x62000, scoped, tag = 'input window, operand 0']
    #allocation3 [shape = 's32[2]{0}', space=sflag, size = 0x8, scoped, tag = 'scoped memory for tpu_custom_call.1']
    #allocation4 [shape = 'u8[200704]{0}', space=vmem, size = 0x31000, scoped, tag = 'input window, operand 1, single buffered']
    #allocation5 [shape = 's32[1]{0}', space=sflag, size = 0x4, scoped, tag = 'scoped memory for tpu_custom_call.1']
    #allocation6 [shape = 'u8[114688]{0}', space=vmem, size = 0x1c000, scoped, tag = 'output window, operand 0']
    %8 = vsyncpa [#allocation3], 0
    %s9 = scalar_lea.sflag [#allocation3], 1
    %10 = vsyncpa %s9, 0
    %11 = vsyncpa [#allocation5], 0
    loop: start=0, step=1, limit=4
    $region2: #{tpu_custom_call.1} parent=1 // loop_pre_header
      _
    $region3: #{tpu_custom_call.1} parent=1 // loop_header
      %s13 = sphi 0, %s17
      %p14 = scmp.ge.s32.totalorder %s13, 4
      %s23 = sphi 0, %s25
      %s26 = sphi 0, %s23
      %s27 = sphi 0, %s26
      %s43 = sphi 0, %s27
      %s47 = sphi 0, %s47
      %s49 = sphi 0, %s47
      %s50 = sphi 0, %s49
      %s64 = sphi 0, %s50
      %s68 = sphi 0, %s68
      %s70 = sphi 0, %s68
      %s71 = sphi 0, %s70
      %s85 = sphi 0, %s71
      %s91 = sphi 0, %s93
      %s94 = sphi 0, %s91
      %s95 = sphi 0, %s94
      %s111 = sphi 0, %s95
    $region4: #{tpu_custom_call.1} parent=1 // loop_header_branch
      %16 = sbr.rel (%p14) target = $region8
    $region5: #{tpu_custom_call.1} parent=1 // loop_body
      %s18 = ssub.s32 %s13, 1
      %s19 = ssub.s32 %s13, 2
      %s20 = sadd.s32 %s13, 1
      %s21 = ssub.s32 %s13, %s20
      %p22 = scmp.eq.s32.totalorder %s21, 0
      %s24 = sadd.s32 %s23, 1
      %s25 = scalar_select %p22, %s23, %s24
      %p28 = pneg %p22
      %p29 = scmp.eq.s32.totalorder %s13, 1
      %p30 = por %p28, %p29
      %p31 = scmp.ne.s32.totalorder %s23, %s26
      %p32 = scmp.eq.s32.totalorder %s13, 0
      %p33 = por %p31, %p32
      %p34 = scmp.ne.s32.totalorder %s23, %s26
      %p35 = scmp.eq.s32.totalorder %s18, 1
      %p36 = por %p34, %p35
      %p37 = scmp.ne.s32.totalorder %s26, %s27
      %p38 = scmp.eq.s32.totalorder %s18, 0
      %p39 = por %p37, %p38
      %p40 = scmp.ne.s32.totalorder %s26, %s27
      %p41 = scmp.eq.s32.totalorder %s19, 1
      %p42 = por %p40, %p41
      %p44 = scmp.ne.s32.totalorder %s27, %s43
      %p45 = scmp.eq.s32.totalorder %s19, 0
      %p46 = por %p44, %p45
      %s48 = sadd.s32 %s47, 1
      %p51 = scmp.eq.s32.totalorder %s13, 1
      %p52 = scmp.ne.s32.totalorder %s47, %s49
      %p53 = scmp.eq.s32.totalorder %s13, 0
      %p54 = por %p52, %p53
      %p55 = scmp.ne.s32.totalorder %s47, %s49
      %p56 = scmp.eq.s32.totalorder %s18, 1
      %p57 = por %p55, %p56
      %p58 = scmp.ne.s32.totalorder %s49, %s50
      %p59 = scmp.eq.s32.totalorder %s18, 0
      %p60 = por %p58, %p59
      %p61 = scmp.ne.s32.totalorder %s49, %s50
      %p62 = scmp.eq.s32.totalorder %s19, 1
      %p63 = por %p61, %p62
      %p65 = scmp.ne.s32.totalorder %s50, %s64
      %p66 = scmp.eq.s32.totalorder %s19, 0
      %p67 = por %p65, %p66
      %s69 = sadd.s32 %s68, 1
      %p72 = scmp.eq.s32.totalorder %s13, 1
      %p73 = scmp.ne.s32.totalorder %s68, %s70
      %p74 = scmp.eq.s32.totalorder %s13, 0
      %p75 = por %p73, %p74
      %p76 = scmp.ne.s32.totalorder %s68, %s70
      %p77 = scmp.eq.s32.totalorder %s18, 1
      %p78 = por %p76, %p77
      %p79 = scmp.ne.s32.totalorder %s70, %s71
      %p80 = scmp.eq.s32.totalorder %s18, 0
      %p81 = por %p79, %p80
      %p82 = scmp.ne.s32.totalorder %s70, %s71
      %p83 = scmp.eq.s32.totalorder %s19, 1
      %p84 = por %p82, %p83
      %p86 = scmp.ne.s32.totalorder %s71, %s85
      %p87 = scmp.eq.s32.totalorder %s19, 0
      %p88 = por %p86, %p87
      %s89 = ssub.s32 %s13, %s20
      %p90 = scmp.eq.s32.totalorder %s89, 0
      %s92 = sadd.s32 %s91, 1
      %s93 = scalar_select %p90, %s91, %s92
      %p96 = pneg %p90
      %p97 = scmp.eq.s32.totalorder %s13, 1
      %p98 = por %p96, %p97
      %p99 = scmp.ne.s32.totalorder %s91, %s94
      %p100 = scmp.eq.s32.totalorder %s13, 0
      %p101 = por %p99, %p100
      %p102 = scmp.ne.s32.totalorder %s91, %s94
      %p103 = scmp.eq.s32.totalorder %s18, 1
      %p104 = por %p102, %p103
      %p105 = scmp.ne.s32.totalorder %s94, %s95
      %p106 = scmp.eq.s32.totalorder %s18, 0
      %p107 = por %p105, %p106
      %p108 = scmp.ne.s32.totalorder %s94, %s95
      %p109 = scmp.eq.s32.totalorder %s19, 1
      %p110 = por %p108, %p109
      %p112 = scmp.ne.s32.totalorder %s95, %s111
      %p113 = scmp.eq.s32.totalorder %s19, 0
      %p114 = por %p112, %p113
      %p115 = scmp.le.s32.totalorder 1, %s13
      %p116 = scmp.lt.s32.totalorder %s13, 3
      %p117 = pnand %p115, %p116
      %p118 = pneg %p117
      // Predicated region
      $region9: #{tpu_custom_call.1} parent=5 // pred_check
        _
      $region10: #{tpu_custom_call.1} parent=5 // pred_check_branch
        %120 = sbr.rel (%p117) target = $region12
      $region11: #{tpu_custom_call.1} parent=5 // pred_region
        %s121 = ssub.s32 %s13, 1
        // Predicated region
        $region13: #{tpu_custom_call.1} parent=11 // pred_check
          %p122 = pneg %p60
        $region14: #{tpu_custom_call.1} parent=11 // pred_check_branch
          %124 = sbr.rel (%p122) target = $region16
        $region15: #{tpu_custom_call.1} parent=11 // pred_region
          %s126 = ssub.s32 6272, 6272
          %127 = vsyncadd [#allocation5], %s126
          %s128 = sshll.u32 [#allocation4], 4
          %s129 = int_to_ptr.vmem [resolvable:$true] %s128
          %134 = dma.hbm_to_vmem [thread:$0]  %s1, 6272, %s129, [#allocation5], 64, 64, 4
        $region16: #{tpu_custom_call.1} parent=11 // pred_fallthru
          _
        // Predicated region
        $region17: #{tpu_custom_call.1} parent=11 // pred_check
          %p135 = pneg %p81
        $region18: #{tpu_custom_call.1} parent=11 // pred_check_branch
          %137 = sbr.rel (%p135) target = $region20
        $region19: #{tpu_custom_call.1} parent=11 // pred_region
          _
        $region20: #{tpu_custom_call.1} parent=11 // pred_fallthru
          _
      $region12: #{tpu_custom_call.1} parent=5 // pred_fallthru
        _
      %p138 = scmp.lt.s32.totalorder %s13, 2
      // Predicated region
      $region21: #{tpu_custom_call.1} parent=5 // pred_check
        %p139 = pneg %p138
      $region22: #{tpu_custom_call.1} parent=5 // pred_check_branch
        %141 = sbr.rel (%p139) target = $region24
      $region23: #{tpu_custom_call.1} parent=5 // pred_region
        // Predicated region
        $region25: #{tpu_custom_call.1} parent=23 // pred_check
          %p142 = pneg %p33
        $region26: #{tpu_custom_call.1} parent=23 // pred_check_branch
          %144 = sbr.rel (%p142) target = $region28
        $region27: #{tpu_custom_call.1} parent=23 // pred_region
          %s145 = sand.u32 %s23, 1
          %s146 = scalar_lea.sflag [#allocation3], %s145
          %s147 = sand.u32 %s23, 1
          %s148 = smul.addr %s147, 392
          %s149 = scalar_lea.vmem [#allocation2], %s148
          %s150 = smul.u32 14, %s13
          %s151 = ssub.s32 25, %s150
          %p152 = scmp.lt.s32.totalorder %s151, 14
          %s153 = scalar_select %p152, %s151, 14
          %s154 = smul.u32 64, %s153
          %s155 = smul.u32 %s154, 7
          %s157 = ssub.s32 6272, %s155
          %158 = vsyncadd %s146, %s157
          %p159 = scmp.ne.s32.totalorder 0, %s155
          %s160 = smul.addr %s150, 7
          %s161 = smul.addr %s160, 64
          %s162 = scalar_lea.hbm %s0, %s161
          %s163 = smul.u32 28, %s153
          %s164 = sshll.u32 %s149, 4
          %s165 = int_to_ptr.vmem [resolvable:$true] %s164
          %s166 = sshll.u32 %s163, 4
          %170 = dma.hbm_to_vmem [thread:$0]  (%p159), %s162, %s166, %s165, %s146, 448, 448, 28
        $region28: #{tpu_custom_call.1} parent=23 // pred_fallthru
          _
      $region24: #{tpu_custom_call.1} parent=5 // pred_fallthru
        _
      %p171 = scmp.le.s32.totalorder 1, %s13
      %p172 = scmp.lt.s32.totalorder %s13, 3
      %p173 = pnand %p171, %p172
      %p174 = pneg %p173
      // Predicated region
      $region29: #{tpu_custom_call.1} parent=5 // pred_check
        _
      $region30: #{tpu_custom_call.1} parent=5 // pred_check_branch
        %176 = sbr.rel (%p173) target = $region32
      $region31: #{tpu_custom_call.1} parent=5 // pred_region
        %s177 = ssub.s32 %s13, 1
        %s178 = sand.u32 %s26, 1
        %s179 = scalar_lea.sflag [#allocation3], %s178
        %s180 = sand.u32 %s26, 1
        %s181 = smul.addr %s180, 392
        %s182 = scalar_lea.vmem [#allocation2], %s181
        // Predicated region
        $region33: #{tpu_custom_call.1} parent=31 // pred_check
          %p183 = pneg %p39
        $region34: #{tpu_custom_call.1} parent=31 // pred_check_branch
          %185 = sbr.rel (%p183) target = $region36
        $region35: #{tpu_custom_call.1} parent=31 // pred_region
          %186 = dma.done %s179, 6272
        $region36: #{tpu_custom_call.1} parent=31 // pred_fallthru
          _
        // Predicated region
        $region37: #{tpu_custom_call.1} parent=31 // pred_check
          %p187 = pneg %p60
        $region38: #{tpu_custom_call.1} parent=31 // pred_check_branch
          %189 = sbr.rel (%p187) target = $region40
        $region39: #{tpu_custom_call.1} parent=31 // pred_region
          %190 = dma.done [#allocation5], 6272
        $region40: #{tpu_custom_call.1} parent=31 // pred_fallthru
          _
        %s191 = sand.u32 %s26, 1
        %s192 = scalar_lea.sflag [#allocation3], %s191
        %s193 = sand.u32 %s26, 1
        %s194 = smul.addr %s193, 392
        %s195 = scalar_lea.vmem [#allocation2], %s194
        %p196 = pneg %p39
        %p197 = pneg %p36
        %p198 = pneg %p60
        %p199 = pneg %p57
        %p200 = pneg %p81
        %p201 = pneg %p78
        %p202 = pneg %p107
        %p203 = pneg %p104
        %s204 = sand.u32 %s94, 1
        %s205 = sand.u32 %s94, 1
        %s206 = smul.addr %s205, 112
        %s207 = scalar_lea.vmem [#allocation6], %s206
        %s208 = smul.u32 14, %s18
        %s209 = ssub.s32 25, %s208
        %p210 = scmp.lt.s32.totalorder %s209, 14
        %s211 = scalar_select %p210, %s209, 14
        %s212 = smul.u32 64, %s211
        %s213 = smul.u32 %s212, 7
        %s214 = smul.u32 14, %s18
        %s215 = ssub.s32 25, %s214
        %p216 = scmp.lt.s32.totalorder %s215, 14
        %s217 = scalar_select %p216, %s215, 14
        %s218 = smul.u32 128, %s217
        %v220 = vld [vmem:[%s182] sm:$0xff]
        %v221 = vld [vmem:[%s182 + $0x8] sm:$0xff]
        %v222 = vld [vmem:[%s182 + $0x10] sm:$0xff]
        %v223 = vld [vmem:[%s182 + $0x18] sm:$0xf]
        %v224 = vld [vmem:[%s182 + $0x1c] sm:$0xff]
        %v225 = vld [vmem:[%s182 + $0x24] sm:$0xff]
        %v226 = vld [vmem:[%s182 + $0x2c] sm:$0xff]
        %v227 = vld [vmem:[%s182 + $0x34] sm:$0xf]
        %v228 = vld [vmem:[%s182 + $0x38] sm:$0xff]
        %v229 = vld [vmem:[%s182 + $0x40] sm:$0xff]
        %v230 = vld [vmem:[%s182 + $0x48] sm:$0xff]
        %v231 = vld [vmem:[%s182 + $0x50] sm:$0xf]
        %v232 = vld [vmem:[%s182 + $0x54] sm:$0xff]
        %v233 = vld [vmem:[%s182 + $0x5c] sm:$0xff]
        %v234 = vld [vmem:[%s182 + $0x64] sm:$0xff]
        %v235 = vld [vmem:[%s182 + $0x6c] sm:$0xf]
        %v236 = vld [vmem:[%s182 + $0x70] sm:$0xff]
        %v237 = vld [vmem:[%s182 + $0x78] sm:$0xff]
        %v238 = vld [vmem:[%s182 + $0x80] sm:$0xff]
        %v239 = vld [vmem:[%s182 + $0x88] sm:$0xf]
        %v240 = vld [vmem:[%s182 + $0x8c] sm:$0xff]
        %v241 = vld [vmem:[%s182 + $0x94] sm:$0xff]
        %v242 = vld [vmem:[%s182 + $0x9c] sm:$0xff]
        %v243 = vld [vmem:[%s182 + $0xa4] sm:$0xf]
        %v244 = vld [vmem:[%s182 + $0xa8] sm:$0xff]
        %v245 = vld [vmem:[%s182 + $0xb0] sm:$0xff]
        %v246 = vld [vmem:[%s182 + $0xb8] sm:$0xff]
        %v247 = vld [vmem:[%s182 + $0xc0] sm:$0xf]
        %v248 = vld [vmem:[%s182 + $0xc4] sm:$0xff]
        %v249 = vld [vmem:[%s182 + $0xcc] sm:$0xff]
        %v250 = vld [vmem:[%s182 + $0xd4] sm:$0xff]
        %v251 = vld [vmem:[%s182 + $0xdc] sm:$0xf]
        %v252 = vld [vmem:[%s182 + $0xe0] sm:$0xff]
        %v253 = vld [vmem:[%s182 + $0xe8] sm:$0xff]
        %v254 = vld [vmem:[%s182 + $0xf0] sm:$0xff]
        %v255 = vld [vmem:[%s182 + $0xf8] sm:$0xf]
        %v256 = vld [vmem:[%s182 + $0xfc] sm:$0xff]
        %v257 = vld [vmem:[%s182 + $0x104] sm:$0xff]
        %v258 = vld [vmem:[%s182 + $0x10c] sm:$0xff]
        %v259 = vld [vmem:[%s182 + $0x114] sm:$0xf]
        %v260 = vld [vmem:[%s182 + $0x118] sm:$0xff]
        %v261 = vld [vmem:[%s182 + $0x120] sm:$0xff]
        %v262 = vld [vmem:[%s182 + $0x128] sm:$0xff]
        %v263 = vld [vmem:[%s182 + $0x130] sm:$0xf]
        %v264 = vld [vmem:[%s182 + $0x134] sm:$0xff]
        %v265 = vld [vmem:[%s182 + $0x13c] sm:$0xff]
        %v266 = vld [vmem:[%s182 + $0x144] sm:$0xff]
        %v267 = vld [vmem:[%s182 + $0x14c] sm:$0xf]
        %v268 = vld [vmem:[%s182 + $0x150] sm:$0xff]
        %v269 = vld [vmem:[%s182 + $0x158] sm:$0xff]
        %v270 = vld [vmem:[%s182 + $0x160] sm:$0xff]
        %v271 = vld [vmem:[%s182 + $0x168] sm:$0xf]
        %v272 = vld [vmem:[%s182 + $0x16c] sm:$0xff]
        %v273 = vld [vmem:[%s182 + $0x174] sm:$0xff]
        %v274 = vld [vmem:[%s182 + $0x17c] sm:$0xff]
        %v275 = vld [vmem:[%s182 + $0x184] sm:$0xf]
        %v276 = vld [vmem:[#allocation4] sm:$0xf]
        %v277 = vld [vmem:[#allocation4 + $0x4] sm:$0xf]
        %v278 = vld [vmem:[#allocation4 + $0x8] sm:$0xf]
        %v279 = vld [vmem:[#allocation4 + $0xc] sm:$0xf]
        %v280 = vld [vmem:[#allocation4 + $0x10] sm:$0xf]
        %v281 = vld [vmem:[#allocation4 + $0x14] sm:$0xf]
        %v282 = vld [vmem:[#allocation4 + $0x18] sm:$0xf]
        %v283 = vld [vmem:[#allocation4 + $0x1c] sm:$0xf]
        %v284 = vld [vmem:[#allocation4 + $0x20] sm:$0xf]
        %v285 = vld [vmem:[#allocation4 + $0x24] sm:$0xf]
        %v286 = vld [vmem:[#allocation4 + $0x28] sm:$0xf]
        %v287 = vld [vmem:[#allocation4 + $0x2c] sm:$0xf]
        %v288 = vld [vmem:[#allocation4 + $0x30] sm:$0xf]
        %v289 = vld [vmem:[#allocation4 + $0x34] sm:$0xf]
        %v290 = vld [vmem:[#allocation4 + $0x38] sm:$0xf]
        %v291 = vld [vmem:[#allocation4 + $0x3c] sm:$0xf]
        %v292 = vld [vmem:[#allocation4 + $0x40] sm:$0xf]
        %v293 = vld [vmem:[#allocation4 + $0x44] sm:$0xf]
        %v294 = vld [vmem:[#allocation4 + $0x48] sm:$0xf]
        %v295 = vld [vmem:[#allocation4 + $0x4c] sm:$0xf]
        %v296 = vld [vmem:[#allocation4 + $0x50] sm:$0xf]
        %v297 = vld [vmem:[#allocation4 + $0x54] sm:$0xf]
        %v298 = vld [vmem:[#allocation4 + $0x58] sm:$0xf]
        %v299 = vld [vmem:[#allocation4 + $0x5c] sm:$0xf]
        %v300 = vld [vmem:[#allocation4 + $0x60] sm:$0xf]
        %v301 = vld [vmem:[#allocation4 + $0x64] sm:$0xf]
        %v302 = vld [vmem:[#allocation4 + $0x68] sm:$0xf]
        %v303 = vld [vmem:[#allocation4 + $0x6c] sm:$0xf]
        %v304 = vld [vmem:[#allocation4 + $0x70] sm:$0xf]
        %v305 = vld [vmem:[#allocation4 + $0x74] sm:$0xf]
        %v306 = vld [vmem:[#allocation4 + $0x78] sm:$0xf]
        %v307 = vld [vmem:[#allocation4 + $0x7c] sm:$0xf]
        %v308 = vld [vmem:[#allocation4 + $0x80] sm:$0xf]
        %v309 = vld [vmem:[#allocation4 + $0x84] sm:$0xf]
        %v310 = vld [vmem:[#allocation4 + $0x88] sm:$0xf]
        %v311 = vld [vmem:[#allocation4 + $0x8c] sm:$0xf]
        %v312 = vld [vmem:[#allocation4 + $0x90] sm:$0xf]
        %v313 = vld [vmem:[#allocation4 + $0x94] sm:$0xf]
        %v314 = vld [vmem:[#allocation4 + $0x98] sm:$0xf]
        %v315 = vld [vmem:[#allocation4 + $0x9c] sm:$0xf]
        %v316 = vld [vmem:[#allocation4 + $0xa0] sm:$0xf]
        %v317 = vld [vmem:[#allocation4 + $0xa4] sm:$0xf]
        %v318 = vld [vmem:[#allocation4 + $0xa8] sm:$0xf]
        %v319 = vld [vmem:[#allocation4 + $0xac] sm:$0xf]
        %v320 = vld [vmem:[#allocation4 + $0xb0] sm:$0xf]
        %v321 = vld [vmem:[#allocation4 + $0xb4] sm:$0xf]
        %v322 = vld [vmem:[#allocation4 + $0xb8] sm:$0xf]
        %v323 = vld [vmem:[#allocation4 + $0xbc] sm:$0xf]
        %v324 = vld [vmem:[#allocation4 + $0xc0] sm:$0xf]
        %v325 = vld [vmem:[#allocation4 + $0xc4] sm:$0xf]
        %v326 = vld [vmem:[#allocation4 + $0xc8] sm:$0xf]
        %v327 = vld [vmem:[#allocation4 + $0xcc] sm:$0xf]
        %v328 = vld [vmem:[#allocation4 + $0xd0] sm:$0xf]
        %v329 = vld [vmem:[#allocation4 + $0xd4] sm:$0xf]
        %v330 = vld [vmem:[#allocation4 + $0xd8] sm:$0xf]
        %v331 = vld [vmem:[#allocation4 + $0xdc] sm:$0xf]
        %v332 = vld [vmem:[#allocation4 + $0xe0] sm:$0xf]
        %v333 = vld [vmem:[#allocation4 + $0xe4] sm:$0xf]
        %v334 = vld [vmem:[#allocation4 + $0xe8] sm:$0xf]
        %v335 = vld [vmem:[#allocation4 + $0xec] sm:$0xf]
        %v336 = vld [vmem:[#allocation4 + $0xf0] sm:$0xf]
        %v337 = vld [vmem:[#allocation4 + $0xf4] sm:$0xf]
        %v338 = vld [vmem:[#allocation4 + $0xf8] sm:$0xf]
        %v339 = vld [vmem:[#allocation4 + $0xfc] sm:$0xf]
        %v340 = vld [vmem:[#allocation4 + $0x100] sm:$0xf]
        %v341 = vld [vmem:[#allocation4 + $0x104] sm:$0xf]
        %v342 = vld [vmem:[#allocation4 + $0x108] sm:$0xf]
        %v343 = vld [vmem:[#allocation4 + $0x10c] sm:$0xf]
        %v344 = vld [vmem:[#allocation4 + $0x110] sm:$0xf]
        %v345 = vld [vmem:[#allocation4 + $0x114] sm:$0xf]
        %v346 = vld [vmem:[#allocation4 + $0x118] sm:$0xf]
        %v347 = vld [vmem:[#allocation4 + $0x11c] sm:$0xf]
        %v348 = vld [vmem:[#allocation4 + $0x120] sm:$0xf]
        %v349 = vld [vmem:[#allocation4 + $0x124] sm:$0xf]
        %v350 = vld [vmem:[#allocation4 + $0x128] sm:$0xf]
        %v351 = vld [vmem:[#allocation4 + $0x12c] sm:$0xf]
        %v352 = vld [vmem:[#allocation4 + $0x130] sm:$0xf]
        %v353 = vld [vmem:[#allocation4 + $0x134] sm:$0xf]
        %v354 = vld [vmem:[#allocation4 + $0x138] sm:$0xf]
        %v355 = vld [vmem:[#allocation4 + $0x13c] sm:$0xf]
        %v356 = vld [vmem:[#allocation4 + $0x140] sm:$0xf]
        %v357 = vld [vmem:[#allocation4 + $0x144] sm:$0xf]
        %v358 = vld [vmem:[#allocation4 + $0x148] sm:$0xf]
        %v359 = vld [vmem:[#allocation4 + $0x14c] sm:$0xf]
        %v360 = vld [vmem:[#allocation4 + $0x150] sm:$0xf]
        %v361 = vld [vmem:[#allocation4 + $0x154] sm:$0xf]
        %v362 = vld [vmem:[#allocation4 + $0x158] sm:$0xf]
        %v363 = vld [vmem:[#allocation4 + $0x15c] sm:$0xf]
        %v364 = vld [vmem:[#allocation4 + $0x160] sm:$0xf]
        %v365 = vld [vmem:[#allocation4 + $0x164] sm:$0xf]
        %v366 = vld [vmem:[#allocation4 + $0x168] sm:$0xf]
        %v367 = vld [vmem:[#allocation4 + $0x16c] sm:$0xf]
        %v368 = vld [vmem:[#allocation4 + $0x170] sm:$0xf]
        %v369 = vld [vmem:[#allocation4 + $0x174] sm:$0xf]
        %v370 = vld [vmem:[#allocation4 + $0x178] sm:$0xf]
        %v371 = vld [vmem:[#allocation4 + $0x17c] sm:$0xf]
        %v372 = vld [vmem:[#allocation4 + $0x180] sm:$0xf]
        %v373 = vld [vmem:[#allocation4 + $0x184] sm:$0xf]
        %v374 = vld [vmem:[%s2] sm:$0x1]
        %v376 = vlaneseq
        %v377 = vshrl.u32 %v376, 7
        %v378 = vsub.s32 0, %v377
        %v379 = vrot.slane %v374, %v378
        %v437 = vunpack.c.l.b16 %v220
        %v438 = vunpack.c.h.b16 %v220
        %v439 = vunpack.c.l.b16 %v221
        %v440 = vunpack.c.h.b16 %v221
        %v441 = vunpack.c.l.b16 %v222
        %v442 = vunpack.c.h.b16 %v222
        %v443 = vunpack.c.l.b16 %v223
        %v444 = vunpack.c.l.b16 %v224
        %v445 = vunpack.c.h.b16 %v224
        %v446 = vunpack.c.l.b16 %v225
        %v447 = vunpack.c.h.b16 %v225
        %v448 = vunpack.c.l.b16 %v226
        %v449 = vunpack.c.h.b16 %v226
        %v450 = vunpack.c.l.b16 %v227
        %v451 = vunpack.c.l.b16 %v228
        %v452 = vunpack.c.h.b16 %v228
        %v453 = vunpack.c.l.b16 %v229
        %v454 = vunpack.c.h.b16 %v229
        %v455 = vunpack.c.l.b16 %v230
        %v456 = vunpack.c.h.b16 %v230
        %v457 = vunpack.c.l.b16 %v231
        %v458 = vunpack.c.l.b16 %v232
        %v459 = vunpack.c.h.b16 %v232
        %v460 = vunpack.c.l.b16 %v233
        %v461 = vunpack.c.h.b16 %v233
        %v462 = vunpack.c.l.b16 %v234
        %v463 = vunpack.c.h.b16 %v234
        %v464 = vunpack.c.l.b16 %v235
        %v465 = vunpack.c.l.b16 %v236
        %v466 = vunpack.c.h.b16 %v236
        %v467 = vunpack.c.l.b16 %v237
        %v468 = vunpack.c.h.b16 %v237
        %v469 = vunpack.c.l.b16 %v238
        %v470 = vunpack.c.h.b16 %v238
        %v471 = vunpack.c.l.b16 %v239
        %v472 = vunpack.c.l.b16 %v240
        %v473 = vunpack.c.h.b16 %v240
        %v474 = vunpack.c.l.b16 %v241
        %v475 = vunpack.c.h.b16 %v241
        %v476 = vunpack.c.l.b16 %v242
        %v477 = vunpack.c.h.b16 %v242
        %v478 = vunpack.c.l.b16 %v243
        %v479 = vunpack.c.l.b16 %v244
        %v480 = vunpack.c.h.b16 %v244
        %v481 = vunpack.c.l.b16 %v245
        %v482 = vunpack.c.h.b16 %v245
        %v483 = vunpack.c.l.b16 %v246
        %v484 = vunpack.c.h.b16 %v246
        %v485 = vunpack.c.l.b16 %v247
        %v486 = vunpack.c.l.b16 %v248
        %v487 = vunpack.c.h.b16 %v248
        %v488 = vunpack.c.l.b16 %v249
        %v489 = vunpack.c.h.b16 %v249
        %v490 = vunpack.c.l.b16 %v250
        %v491 = vunpack.c.h.b16 %v250
        %v492 = vunpack.c.l.b16 %v251
        %v493 = vunpack.c.l.b16 %v252
        %v494 = vunpack.c.h.b16 %v252
        %v495 = vunpack.c.l.b16 %v253
        %v496 = vunpack.c.h.b16 %v253
        %v497 = vunpack.c.l.b16 %v254
        %v498 = vunpack.c.h.b16 %v254
        %v499 = vunpack.c.l.b16 %v255
        %v500 = vunpack.c.l.b16 %v256
        %v501 = vunpack.c.h.b16 %v256
        %v502 = vunpack.c.l.b16 %v257
        %v503 = vunpack.c.h.b16 %v257
        %v504 = vunpack.c.l.b16 %v258
        %v505 = vunpack.c.h.b16 %v258
        %v506 = vunpack.c.l.b16 %v259
        %v507 = vunpack.c.l.b16 %v260
        %v508 = vunpack.c.h.b16 %v260
        %v509 = vunpack.c.l.b16 %v261
        %v510 = vunpack.c.h.b16 %v261
        %v511 = vunpack.c.l.b16 %v262
        %v512 = vunpack.c.h.b16 %v262
        %v513 = vunpack.c.l.b16 %v263
        %v514 = vunpack.c.l.b16 %v264
        %v515 = vunpack.c.h.b16 %v264
        %v516 = vunpack.c.l.b16 %v265
        %v517 = vunpack.c.h.b16 %v265
        %v518 = vunpack.c.l.b16 %v266
        %v519 = vunpack.c.h.b16 %v266
        %v520 = vunpack.c.l.b16 %v267
        %v521 = vunpack.c.l.b16 %v268
        %v522 = vunpack.c.h.b16 %v268
        %v523 = vunpack.c.l.b16 %v269
        %v524 = vunpack.c.h.b16 %v269
        %v525 = vunpack.c.l.b16 %v270
        %v526 = vunpack.c.h.b16 %v270
        %v527 = vunpack.c.l.b16 %v271
        %v528 = vunpack.c.l.b16 %v272
        %v529 = vunpack.c.h.b16 %v272
        %v530 = vunpack.c.l.b16 %v273
        %v531 = vunpack.c.h.b16 %v273
        %v532 = vunpack.c.l.b16 %v274
        %v533 = vunpack.c.h.b16 %v274
        %v534 = vunpack.c.l.b16 %v275
        %v535 = vpack.c.b16 %v444, %v437
        %v536 = vpack.c.b16 %v445, %v438
        %v537 = vpack.c.b16 %v446, %v439
        %v538 = vpack.c.b16 %v447, %v440
        %v539 = vpack.c.b16 %v448, %v441
        %v540 = vpack.c.b16 %v449, %v442
        %v541 = vpack.c.b16 %v450, %v443
        %v542 = vpack.c.b16 %v458, %v451
        %v543 = vpack.c.b16 %v459, %v452
        %v544 = vpack.c.b16 %v460, %v453
        %v545 = vpack.c.b16 %v461, %v454
        %v546 = vpack.c.b16 %v462, %v455
        %v547 = vpack.c.b16 %v463, %v456
        %v548 = vpack.c.b16 %v464, %v457
        %v549 = vpack.c.b16 %v472, %v465
        %v550 = vpack.c.b16 %v473, %v466
        %v551 = vpack.c.b16 %v474, %v467
        %v552 = vpack.c.b16 %v475, %v468
        %v553 = vpack.c.b16 %v476, %v469
        %v554 = vpack.c.b16 %v477, %v470
        %v555 = vpack.c.b16 %v478, %v471
        %v556 = vpack.c.b16 %v486, %v479
        %v557 = vpack.c.b16 %v487, %v480
        %v558 = vpack.c.b16 %v488, %v481
        %v559 = vpack.c.b16 %v489, %v482
        %v560 = vpack.c.b16 %v490, %v483
        %v561 = vpack.c.b16 %v491, %v484
        %v562 = vpack.c.b16 %v492, %v485
        %v563 = vpack.c.b16 %v500, %v493
        %v564 = vpack.c.b16 %v501, %v494
        %v565 = vpack.c.b16 %v502, %v495
        %v566 = vpack.c.b16 %v503, %v496
        %v567 = vpack.c.b16 %v504, %v497
        %v568 = vpack.c.b16 %v505, %v498
        %v569 = vpack.c.b16 %v506, %v499
        %v570 = vpack.c.b16 %v514, %v507
        %v571 = vpack.c.b16 %v515, %v508
        %v572 = vpack.c.b16 %v516, %v509
        %v573 = vpack.c.b16 %v517, %v510
        %v574 = vpack.c.b16 %v518, %v511
        %v575 = vpack.c.b16 %v519, %v512
        %v576 = vpack.c.b16 %v520, %v513
        %v577 = vpack.c.b16 %v528, %v521
        %v578 = vpack.c.b16 %v529, %v522
        %v579 = vpack.c.b16 %v530, %v523
        %v580 = vpack.c.b16 %v531, %v524
        %v581 = vpack.c.b16 %v532, %v525
        %v582 = vpack.c.b16 %v533, %v526
        %v583 = vpack.c.b16 %v534, %v527
        %v724 = vunpack.c.l.b16 %v276
        %v725 = vunpack.c.l.b16 %v277
        %v726 = vunpack.c.l.b16 %v278
        %v727 = vunpack.c.l.b16 %v279
        %v728 = vunpack.c.l.b16 %v280
        %v729 = vunpack.c.l.b16 %v281
        %v730 = vunpack.c.l.b16 %v282
        %v731 = vunpack.c.l.b16 %v283
        %v732 = vunpack.c.l.b16 %v284
        %v733 = vunpack.c.l.b16 %v285
        %v734 = vunpack.c.l.b16 %v286
        %v735 = vunpack.c.l.b16 %v287
        %v736 = vunpack.c.l.b16 %v288
        %v737 = vunpack.c.l.b16 %v289
        %v738 = vunpack.c.l.b16 %v290
        %v739 = vunpack.c.l.b16 %v291
        %v740 = vunpack.c.l.b16 %v292
        %v741 = vunpack.c.l.b16 %v293
        %v742 = vunpack.c.l.b16 %v294
        %v743 = vunpack.c.l.b16 %v295
        %v744 = vunpack.c.l.b16 %v296
        %v745 = vunpack.c.l.b16 %v297
        %v746 = vunpack.c.l.b16 %v298
        %v747 = vunpack.c.l.b16 %v299
        %v748 = vunpack.c.l.b16 %v300
        %v749 = vunpack.c.l.b16 %v301
        %v750 = vunpack.c.l.b16 %v302
        %v751 = vunpack.c.l.b16 %v303
        %v752 = vunpack.c.l.b16 %v304
        %v753 = vunpack.c.l.b16 %v305
        %v754 = vunpack.c.l.b16 %v306
        %v755 = vunpack.c.l.b16 %v307
        %v756 = vunpack.c.l.b16 %v308
        %v757 = vunpack.c.l.b16 %v309
        %v758 = vunpack.c.l.b16 %v310
        %v759 = vunpack.c.l.b16 %v311
        %v760 = vunpack.c.l.b16 %v312
        %v761 = vunpack.c.l.b16 %v313
        %v762 = vunpack.c.l.b16 %v314
        %v763 = vunpack.c.l.b16 %v315
        %v764 = vunpack.c.l.b16 %v316
        %v765 = vunpack.c.l.b16 %v317
        %v766 = vunpack.c.l.b16 %v318
        %v767 = vunpack.c.l.b16 %v319
        %v768 = vunpack.c.l.b16 %v320
        %v769 = vunpack.c.l.b16 %v321
        %v770 = vunpack.c.l.b16 %v322
        %v771 = vunpack.c.l.b16 %v323
        %v772 = vunpack.c.l.b16 %v324
        %v773 = vunpack.c.l.b16 %v325
        %v774 = vunpack.c.l.b16 %v326
        %v775 = vunpack.c.l.b16 %v327
        %v776 = vunpack.c.l.b16 %v328
        %v777 = vunpack.c.l.b16 %v329
        %v778 = vunpack.c.l.b16 %v330
        %v779 = vunpack.c.l.b16 %v331
        %v780 = vunpack.c.l.b16 %v332
        %v781 = vunpack.c.l.b16 %v333
        %v782 = vunpack.c.l.b16 %v334
        %v783 = vunpack.c.l.b16 %v335
        %v784 = vunpack.c.l.b16 %v336
        %v785 = vunpack.c.l.b16 %v337
        %v786 = vunpack.c.l.b16 %v338
        %v787 = vunpack.c.l.b16 %v339
        %v788 = vunpack.c.l.b16 %v340
        %v789 = vunpack.c.l.b16 %v341
        %v790 = vunpack.c.l.b16 %v342
        %v791 = vunpack.c.l.b16 %v343
        %v792 = vunpack.c.l.b16 %v344
        %v793 = vunpack.c.l.b16 %v345
        %v794 = vunpack.c.l.b16 %v346
        %v795 = vunpack.c.l.b16 %v347
        %v796 = vunpack.c.l.b16 %v348
        %v797 = vunpack.c.l.b16 %v349
        %v798 = vunpack.c.l.b16 %v350
        %v799 = vunpack.c.l.b16 %v351
        %v800 = vunpack.c.l.b16 %v352
        %v801 = vunpack.c.l.b16 %v353
        %v802 = vunpack.c.l.b16 %v354
        %v803 = vunpack.c.l.b16 %v355
        %v804 = vunpack.c.l.b16 %v356
        %v805 = vunpack.c.l.b16 %v357
        %v806 = vunpack.c.l.b16 %v358
        %v807 = vunpack.c.l.b16 %v359
        %v808 = vunpack.c.l.b16 %v360
        %v809 = vunpack.c.l.b16 %v361
        %v810 = vunpack.c.l.b16 %v362
        %v811 = vunpack.c.l.b16 %v363
        %v812 = vunpack.c.l.b16 %v364
        %v813 = vunpack.c.l.b16 %v365
        %v814 = vunpack.c.l.b16 %v366
        %v815 = vunpack.c.l.b16 %v367
        %v816 = vunpack.c.l.b16 %v368
        %v817 = vunpack.c.l.b16 %v369
        %v818 = vunpack.c.l.b16 %v370
        %v819 = vunpack.c.l.b16 %v371
        %v820 = vunpack.c.l.b16 %v372
        %v821 = vunpack.c.l.b16 %v373
        %v822 = vpack.c.b16 %v725, %v724
        %v823 = vpack.c.b16 %v727, %v726
        %v824 = vpack.c.b16 %v729, %v728
        %v825 = vpack.c.b16 %v731, %v730
        %v826 = vpack.c.b16 %v733, %v732
        %v827 = vpack.c.b16 %v735, %v734
        %v828 = vpack.c.b16 %v737, %v736
        %v829 = vpack.c.b16 %v739, %v738
        %v830 = vpack.c.b16 %v741, %v740
        %v831 = vpack.c.b16 %v743, %v742
        %v832 = vpack.c.b16 %v745, %v744
        %v833 = vpack.c.b16 %v747, %v746
        %v834 = vpack.c.b16 %v749, %v748
        %v835 = vpack.c.b16 %v751, %v750
        %v836 = vpack.c.b16 %v753, %v752
        %v837 = vpack.c.b16 %v755, %v754
        %v838 = vpack.c.b16 %v757, %v756
        %v839 = vpack.c.b16 %v759, %v758
        %v840 = vpack.c.b16 %v761, %v760
        %v841 = vpack.c.b16 %v763, %v762
        %v842 = vpack.c.b16 %v765, %v764
        %v843 = vpack.c.b16 %v767, %v766
        %v844 = vpack.c.b16 %v769, %v768
        %v845 = vpack.c.b16 %v771, %v770
        %v846 = vpack.c.b16 %v773, %v772
        %v847 = vpack.c.b16 %v775, %v774
        %v848 = vpack.c.b16 %v777, %v776
        %v849 = vpack.c.b16 %v779, %v778
        %v850 = vpack.c.b16 %v781, %v780
        %v851 = vpack.c.b16 %v783, %v782
        %v852 = vpack.c.b16 %v785, %v784
        %v853 = vpack.c.b16 %v787, %v786
        %v854 = vpack.c.b16 %v789, %v788
        %v855 = vpack.c.b16 %v791, %v790
        %v856 = vpack.c.b16 %v793, %v792
        %v857 = vpack.c.b16 %v795, %v794
        %v858 = vpack.c.b16 %v797, %v796
        %v859 = vpack.c.b16 %v799, %v798
        %v860 = vpack.c.b16 %v801, %v800
        %v861 = vpack.c.b16 %v803, %v802
        %v862 = vpack.c.b16 %v805, %v804
        %v863 = vpack.c.b16 %v807, %v806
        %v864 = vpack.c.b16 %v809, %v808
        %v865 = vpack.c.b16 %v811, %v810
        %v866 = vpack.c.b16 %v813, %v812
        %v867 = vpack.c.b16 %v815, %v814
        %v868 = vpack.c.b16 %v817, %v816
        %v869 = vpack.c.b16 %v819, %v818
        %v870 = vpack.c.b16 %v821, %v820
        %vm920 = vcmask 130048
        %v922 = vsel %vm920, %v541, 0
        %v925 = vsel %vm920, %v548, 0
        %v928 = vsel %vm920, %v555, 0
        %v931 = vsel %vm920, %v562, 0
        %v934 = vsel %vm920, %v569, 0
        %v937 = vsel %vm920, %v576, 0
        %v940 = vsel %vm920, %v583, 0
        %942 = vmatprep.subr.bf16.mxu0 0
        %943 = vmatpush1.bf16.msra.mxu0 %v822
        %944 = vmatprep.subr.bf16.mxu0 0
        %945 = vmatpush1.bf16.msra.mxu0 %v823
        %946 = vmatprep.subr.bf16.mxu0 0
        %947 = vmatpush1.bf16.msra.mxu0 %v824
        %948 = vmatprep.subr.bf16.mxu0 0
        %949 = vmatpush1.bf16.msra.mxu0 %v825
        %950 = vmatprep.subr.bf16.mxu0 0
        %951 = vmatpush1.bf16.msra.mxu0 %v826
        %952 = vmatprep.subr.bf16.mxu0 0
        %953 = vmatpush1.bf16.msra.mxu0 %v827
        %954 = vmatprep.subr.bf16.mxu0 0
        %955 = vmatpush1.bf16.msra.mxu0 %v828
        %956 = vmatprep.subr.bf16.mxu0 0
        %957 = vmatpush1.bf16.msra.mxu0 %v829
        %958 = vmatprep.subr.bf16.mxu0 0
        %959 = vmatpush1.bf16.msra.mxu0 %v830
        %960 = vmatprep.subr.bf16.mxu0 0
        %961 = vmatpush1.bf16.msra.mxu0 %v831
        %962 = vmatprep.subr.bf16.mxu0 0
        %963 = vmatpush1.bf16.msra.mxu0 %v832
        %964 = vmatprep.subr.bf16.mxu0 0
        %965 = vmatpush1.bf16.msra.mxu0 %v833
        %966 = vmatprep.subr.bf16.mxu0 0
        %967 = vmatpush1.bf16.msra.mxu0 %v834
        %968 = vmatprep.subr.bf16.mxu0 0
        %969 = vmatpush1.bf16.msra.mxu0 %v835
        %970 = vmatprep.subr.bf16.mxu0 0
        %971 = vmatpush1.bf16.msra.mxu0 %v836
        %972 = vmatprep.subr.bf16.mxu0 0
        %973 = vmatpush1.bf16.msra.mxu0 %v837
        %974 = vmatprep.mubr.bf16.mxu0 %v536
        %975 = vmatmul.mubr.bf16.gmra.mrb[0].mxu0 %v535
        %v976 = vpop.f32.mrb[0].mxu0
        %v977 = vadd.f32 %v379, %v976
        %v978 = vpop.f32.mrb[0].mxu0
        %v979 = vpop.f32.mrb[0].mxu0
        %v980 = vadd.f32 %v379, %v979
        %v981 = vpop.f32.mrb[0].mxu0
        %982 = vmatprep.mubr.bf16.mxu0 %v543
        %983 = vmatmul.mubr.bf16.gmra.mrb[0].mxu0 %v542
        %v984 = vpop.f32.mrb[0].mxu0
        %v985 = vadd.f32 %v379, %v984
        %v986 = vpop.f32.mrb[0].mxu0
        %v987 = vpop.f32.mrb[0].mxu0
        %v988 = vadd.f32 %v379, %v987
        %v989 = vpop.f32.mrb[0].mxu0
        %990 = vmatprep.mubr.bf16.mxu0 %v550
        %991 = vmatmul.mubr.bf16.gmra.mrb[0].mxu0 %v549
        %v992 = vpop.f32.mrb[0].mxu0
        %v993 = vadd.f32 %v379, %v992
        %v994 = vpop.f32.mrb[0].mxu0
        %v995 = vpop.f32.mrb[0].mxu0
        %v996 = vadd.f32 %v379, %v995
        %v997 = vpop.f32.mrb[0].mxu0
        %998 = vmatprep.mubr.bf16.mxu0 %v557
        %999 = vmatmul.mubr.bf16.gmra.mrb[0].mxu0 %v556
        %v1000 = vpop.f32.mrb[0].mxu0
        %v1001 = vadd.f32 %v379, %v1000
        %v1002 = vpop.f32.mrb[0].mxu0
        %v1003 = vpop.f32.mrb[0].mxu0
        %v1004 = vadd.f32 %v379, %v1003
        %v1005 = vpop.f32.mrb[0].mxu0
        %1006 = vmatprep.mubr.bf16.mxu0 %v564
        %1007 = vmatmul.mubr.bf16.gmra.mrb[0].mxu0 %v563
        %v1008 = vpop.f32.mrb[0].mxu0
        %v1009 = vadd.f32 %v379, %v1008
        %v1010 = vpop.f32.mrb[0].mxu0
        %v1011 = vpop.f32.mrb[0].mxu0
        %v1012 = vadd.f32 %v379, %v1011
        %v1013 = vpop.f32.mrb[0].mxu0
        %1014 = vmatprep.mubr.bf16.mxu0 %v571
        %1015 = vmatmul.mubr.bf16.gmra.mrb[0].mxu0 %v570
        %v1016 = vpop.f32.mrb[0].mxu0
        %v1017 = vadd.f32 %v379, %v1016
        %v1018 = vpop.f32.mrb[0].mxu0
        %v1019 = vpop.f32.mrb[0].mxu0
        %v1020 = vadd.f32 %v379, %v1019
        %v1021 = vpop.f32.mrb[0].mxu0
        %1022 = vmatprep.mubr.bf16.mxu0 %v578
        %1023 = vmatmul.mubr.bf16.gmra.mrb[0].mxu0 %v577
        %v1024 = vpop.f32.mrb[0].mxu0
        %v1025 = vadd.f32 %v379, %v1024
        %v1026 = vpop.f32.mrb[0].mxu0
        %v1027 = vpop.f32.mrb[0].mxu0
        %v1028 = vadd.f32 %v379, %v1027
        %v1029 = vpop.f32.mrb[0].mxu0
        %1030 = vdwg.mxu0
        %1031 = vmatprep.subr.bf16.mxu0 0
        %1032 = vmatpush1.bf16.msra.mxu0 %v838
        %1033 = vmatprep.subr.bf16.mxu0 0
        %1034 = vmatpush1.bf16.msra.mxu0 %v839
        %1035 = vmatprep.subr.bf16.mxu0 0
        %1036 = vmatpush1.bf16.msra.mxu0 %v840
        %1037 = vmatprep.subr.bf16.mxu0 0
        %1038 = vmatpush1.bf16.msra.mxu0 %v841
        %1039 = vmatprep.subr.bf16.mxu0 0
        %1040 = vmatpush1.bf16.msra.mxu0 %v842
        %1041 = vmatprep.subr.bf16.mxu0 0
        %1042 = vmatpush1.bf16.msra.mxu0 %v843
        %1043 = vmatprep.subr.bf16.mxu0 0
        %1044 = vmatpush1.bf16.msra.mxu0 %v844
        %1045 = vmatprep.subr.bf16.mxu0 0
        %1046 = vmatpush1.bf16.msra.mxu0 %v845
        %1047 = vmatprep.subr.bf16.mxu0 0
        %1048 = vmatpush1.bf16.msra.mxu0 %v846
        %1049 = vmatprep.subr.bf16.mxu0 0
        %1050 = vmatpush1.bf16.msra.mxu0 %v847
        %1051 = vmatprep.subr.bf16.mxu0 0
        %1052 = vmatpush1.bf16.msra.mxu0 %v848
        %1053 = vmatprep.subr.bf16.mxu0 0
        %1054 = vmatpush1.bf16.msra.mxu0 %v849
        %1055 = vmatprep.subr.bf16.mxu0 0
        %1056 = vmatpush1.bf16.msra.mxu0 %v850
        %1057 = vmatprep.subr.bf16.mxu0 0
        %1058 = vmatpush1.bf16.msra.mxu0 %v851
        %1059 = vmatprep.subr.bf16.mxu0 0
        %1060 = vmatpush1.bf16.msra.mxu0 %v852
        %1061 = vmatprep.subr.bf16.mxu0 0
        %1062 = vmatpush1.bf16.msra.mxu0 %v853
        %1063 = vmatprep.mubr.bf16.mxu0 %v538
        %1064 = vmatmul.mubr.bf16.gmra.mrb[0].mxu0 %v537
        %v1065 = vpop.f32.mrb[0].mxu0
        %v1066 = vadd.f32 %v977, %v1065
        %v1067 = vpop.f32.mrb[0].mxu0
        %v1068 = vpop.f32.mrb[0].mxu0
        %v1069 = vadd.f32 %v980, %v1068
        %v1070 = vpop.f32.mrb[0].mxu0
        %1071 = vmatprep.mubr.bf16.mxu0 %v545
        %1072 = vmatmul.mubr.bf16.gmra.mrb[0].mxu0 %v544
        %v1073 = vpop.f32.mrb[0].mxu0
        %v1074 = vadd.f32 %v985, %v1073
        %v1075 = vpop.f32.mrb[0].mxu0
        %v1076 = vpop.f32.mrb[0].mxu0
        %v1077 = vadd.f32 %v988, %v1076
        %v1078 = vpop.f32.mrb[0].mxu0
        %1079 = vmatprep.mubr.bf16.mxu0 %v552
        %1080 = vmatmul.mubr.bf16.gmra.mrb[0].mxu0 %v551
        %v1081 = vpop.f32.mrb[0].mxu0
        %v1082 = vadd.f32 %v993, %v1081
        %v1083 = vpop.f32.mrb[0].mxu0
        %v1084 = vpop.f32.mrb[0].mxu0
        %v1085 = vadd.f32 %v996, %v1084
        %v1086 = vpop.f32.mrb[0].mxu0
        %1087 = vmatprep.mubr.bf16.mxu0 %v559
        %1088 = vmatmul.mubr.bf16.gmra.mrb[0].mxu0 %v558
        %v1089 = vpop.f32.mrb[0].mxu0
        %v1090 = vadd.f32 %v1001, %v1089
        %v1091 = vpop.f32.mrb[0].mxu0
        %v1092 = vpop.f32.mrb[0].mxu0
        %v1093 = vadd.f32 %v1004, %v1092
        %v1094 = vpop.f32.mrb[0].mxu0
        %1095 = vmatprep.mubr.bf16.mxu0 %v566
        %1096 = vmatmul.mubr.bf16.gmra.mrb[0].mxu0 %v565
        %v1097 = vpop.f32.mrb[0].mxu0
        %v1098 = vadd.f32 %v1009, %v1097
        %v1099 = vpop.f32.mrb[0].mxu0
        %v1100 = vpop.f32.mrb[0].mxu0
        %v1101 = vadd.f32 %v1012, %v1100
        %v1102 = vpop.f32.mrb[0].mxu0
        %1103 = vmatprep.mubr.bf16.mxu0 %v573
        %1104 = vmatmul.mubr.bf16.gmra.mrb[0].mxu0 %v572
        %v1105 = vpop.f32.mrb[0].mxu0
        %v1106 = vadd.f32 %v1017, %v1105
        %v1107 = vpop.f32.mrb[0].mxu0
        %v1108 = vpop.f32.mrb[0].mxu0
        %v1109 = vadd.f32 %v1020, %v1108
        %v1110 = vpop.f32.mrb[0].mxu0
        %1111 = vmatprep.mubr.bf16.mxu0 %v580
        %1112 = vmatmul.mubr.bf16.gmra.mrb[0].mxu0 %v579
        %v1113 = vpop.f32.mrb[0].mxu0
        %v1114 = vadd.f32 %v1025, %v1113
        %v1115 = vpop.f32.mrb[0].mxu0
        %v1116 = vpop.f32.mrb[0].mxu0
        %v1117 = vadd.f32 %v1028, %v1116
        %v1118 = vpop.f32.mrb[0].mxu0
        %1119 = vdwg.mxu0
        %1120 = vmatprep.subr.bf16.mxu0 0
        %1121 = vmatpush1.bf16.msra.mxu0 %v854
        %1122 = vmatprep.subr.bf16.mxu0 0
        %1123 = vmatpush1.bf16.msra.mxu0 %v855
        %1124 = vmatprep.subr.bf16.mxu0 0
        %1125 = vmatpush1.bf16.msra.mxu0 %v856
        %1126 = vmatprep.subr.bf16.mxu0 0
        %1127 = vmatpush1.bf16.msra.mxu0 %v857
        %1128 = vmatprep.subr.bf16.mxu0 0
        %1129 = vmatpush1.bf16.msra.mxu0 %v858
        %1130 = vmatprep.subr.bf16.mxu0 0
        %1131 = vmatpush1.bf16.msra.mxu0 %v859
        %1132 = vmatprep.subr.bf16.mxu0 0
        %1133 = vmatpush1.bf16.msra.mxu0 %v860
        %1134 = vmatprep.subr.bf16.mxu0 0
        %1135 = vmatpush1.bf16.msra.mxu0 %v861
        %1136 = vmatprep.subr.bf16.mxu0 0
        %1137 = vmatpush1.bf16.msra.mxu0 %v862
        %1138 = vmatprep.subr.bf16.mxu0 0
        %1139 = vmatpush1.bf16.msra.mxu0 %v863
        %1140 = vmatprep.subr.bf16.mxu0 0
        %1141 = vmatpush1.bf16.msra.mxu0 %v864
        %1142 = vmatprep.subr.bf16.mxu0 0
        %1143 = vmatpush1.bf16.msra.mxu0 %v865
        %1144 = vmatprep.subr.bf16.mxu0 0
        %1145 = vmatpush1.bf16.msra.mxu0 %v866
        %1146 = vmatprep.subr.bf16.mxu0 0
        %1147 = vmatpush1.bf16.msra.mxu0 %v867
        %1148 = vmatprep.subr.bf16.mxu0 0
        %1149 = vmatpush1.bf16.msra.mxu0 %v868
        %1150 = vmatprep.subr.bf16.mxu0 0
        %1151 = vmatpush1.bf16.msra.mxu0 %v869
        %1152 = vmatprep.mubr.bf16.mxu0 %v540
        %1153 = vmatmul.mubr.bf16.gmra.mrb[0].mxu0 %v539
        %v1154 = vpop.f32.mrb[0].mxu0
        %v1155 = vadd.f32 %v1066, %v1154
        %v1156 = vpop.f32.mrb[0].mxu0
        %v1157 = vpop.f32.mrb[0].mxu0
        %v1158 = vadd.f32 %v1069, %v1157
        %v1159 = vpop.f32.mrb[0].mxu0
        %1160 = vmatprep.mubr.bf16.mxu0 %v547
        %1161 = vmatmul.mubr.bf16.gmra.mrb[0].mxu0 %v546
        %v1162 = vpop.f32.mrb[0].mxu0
        %v1163 = vadd.f32 %v1074, %v1162
        %v1164 = vpop.f32.mrb[0].mxu0
        %v1165 = vpop.f32.mrb[0].mxu0
        %v1166 = vadd.f32 %v1077, %v1165
        %v1167 = vpop.f32.mrb[0].mxu0
        %1168 = vmatprep.mubr.bf16.mxu0 %v554
        %1169 = vmatmul.mubr.bf16.gmra.mrb[0].mxu0 %v553
        %v1170 = vpop.f32.mrb[0].mxu0
        %v1171 = vadd.f32 %v1082, %v1170
        %v1172 = vpop.f32.mrb[0].mxu0
        %v1173 = vpop.f32.mrb[0].mxu0
        %v1174 = vadd.f32 %v1085, %v1173
        %v1175 = vpop.f32.mrb[0].mxu0
        %1176 = vmatprep.mubr.bf16.mxu0 %v561
        %1177 = vmatmul.mubr.bf16.gmra.mrb[0].mxu0 %v560
        %v1178 = vpop.f32.mrb[0].mxu0
        %v1179 = vadd.f32 %v1090, %v1178
        %v1180 = vpop.f32.mrb[0].mxu0
        %v1181 = vpop.f32.mrb[0].mxu0
        %v1182 = vadd.f32 %v1093, %v1181
        %v1183 = vpop.f32.mrb[0].mxu0
        %1184 = vmatprep.mubr.bf16.mxu0 %v568
        %1185 = vmatmul.mubr.bf16.gmra.mrb[0].mxu0 %v567
        %v1186 = vpop.f32.mrb[0].mxu0
        %v1187 = vadd.f32 %v1098, %v1186
        %v1188 = vpop.f32.mrb[0].mxu0
        %v1189 = vpop.f32.mrb[0].mxu0
        %v1190 = vadd.f32 %v1101, %v1189
        %v1191 = vpop.f32.mrb[0].mxu0
        %1192 = vmatprep.mubr.bf16.mxu0 %v575
        %1193 = vmatmul.mubr.bf16.gmra.mrb[0].mxu0 %v574
        %v1194 = vpop.f32.mrb[0].mxu0
        %v1195 = vadd.f32 %v1106, %v1194
        %v1196 = vpop.f32.mrb[0].mxu0
        %v1197 = vpop.f32.mrb[0].mxu0
        %v1198 = vadd.f32 %v1109, %v1197
        %v1199 = vpop.f32.mrb[0].mxu0
        %1200 = vmatprep.mubr.bf16.mxu0 %v582
        %1201 = vmatmul.mubr.bf16.gmra.mrb[0].mxu0 %v581
        %v1202 = vpop.f32.mrb[0].mxu0
        %v1203 = vadd.f32 %v1114, %v1202
        %v1204 = vpop.f32.mrb[0].mxu0
        %v1205 = vpop.f32.mrb[0].mxu0
        %v1206 = vadd.f32 %v1117, %v1205
        %v1207 = vpop.f32.mrb[0].mxu0
        %1208 = vdwg.mxu0
        %1209 = vmatprep.subr.bf16.mxu0 0
        %1210 = vmatpush1.bf16.msra.mxu0 %v870
        %1211 = vmatprep.subr.bf16.mxu0 0
        %1212 = vmatpush1.bf16.msra.mxu0 0
        %1213 = vmatprep.subr.bf16.mxu0 0
        %1214 = vmatpush1.bf16.msra.mxu0 0
        %1215 = vmatprep.subr.bf16.mxu0 0
        %1216 = vmatpush1.bf16.msra.mxu0 0
        %1217 = vmatprep.subr.bf16.mxu0 0
        %1218 = vmatpush1.bf16.msra.mxu0 0
        %1219 = vmatprep.subr.bf16.mxu0 0
        %1220 = vmatpush1.bf16.msra.mxu0 0
        %1221 = vmatprep.subr.bf16.mxu0 0
        %1222 = vmatpush1.bf16.msra.mxu0 0
        %1223 = vmatprep.subr.bf16.mxu0 0
        %1224 = vmatpush1.bf16.msra.mxu0 0
        %1225 = vmatprep.subr.bf16.mxu0 0
        %1226 = vmatpush1.bf16.msra.mxu0 0
        %1227 = vmatprep.subr.bf16.mxu0 0
        %1228 = vmatpush1.bf16.msra.mxu0 0
        %1229 = vmatprep.subr.bf16.mxu0 0
        %1230 = vmatpush1.bf16.msra.mxu0 0
        %1231 = vmatprep.subr.bf16.mxu0 0
        %1232 = vmatpush1.bf16.msra.mxu0 0
        %1233 = vmatprep.subr.bf16.mxu0 0
        %1234 = vmatpush1.bf16.msra.mxu0 0
        %1235 = vmatprep.subr.bf16.mxu0 0
        %1236 = vmatpush1.bf16.msra.mxu0 0
        %1237 = vmatprep.subr.bf16.mxu0 0
        %1238 = vmatpush1.bf16.msra.mxu0 0
        %1239 = vmatprep.subr.bf16.mxu0 0
        %1240 = vmatpush1.bf16.msra.mxu0 0
        %1241 = vmatprep.mubr.bf16.mxu0 0
        %1242 = vmatmul.mubr.bf16.gmra.mrb[0].mxu0 %v922
        %v1243 = vpop.f32.mrb[0].mxu0
        %v1244 = vadd.f32 %v1155, %v1243
        %v1245 = vpop.f32.mrb[0].mxu0
        %v1246 = vpop.f32.mrb[0].mxu0
        %v1247 = vadd.f32 %v1158, %v1246
        %v1248 = vpop.f32.mrb[0].mxu0
        %1249 = vmatprep.mubr.bf16.mxu0 0
        %1250 = vmatmul.mubr.bf16.gmra.mrb[0].mxu0 %v925
        %v1251 = vpop.f32.mrb[0].mxu0
        %v1252 = vadd.f32 %v1163, %v1251
        %v1253 = vpop.f32.mrb[0].mxu0
        %v1254 = vpop.f32.mrb[0].mxu0
        %v1255 = vadd.f32 %v1166, %v1254
        %v1256 = vpop.f32.mrb[0].mxu0
        %1257 = vmatprep.mubr.bf16.mxu0 0
        %1258 = vmatmul.mubr.bf16.gmra.mrb[0].mxu0 %v928
        %v1259 = vpop.f32.mrb[0].mxu0
        %v1260 = vadd.f32 %v1171, %v1259
        %v1261 = vpop.f32.mrb[0].mxu0
        %v1262 = vpop.f32.mrb[0].mxu0
        %v1263 = vadd.f32 %v1174, %v1262
        %v1264 = vpop.f32.mrb[0].mxu0
        %1265 = vmatprep.mubr.bf16.mxu0 0
        %1266 = vmatmul.mubr.bf16.gmra.mrb[0].mxu0 %v931
        %v1267 = vpop.f32.mrb[0].mxu0
        %v1268 = vadd.f32 %v1179, %v1267
        %v1269 = vpop.f32.mrb[0].mxu0
        %v1270 = vpop.f32.mrb[0].mxu0
        %v1271 = vadd.f32 %v1182, %v1270
        %v1272 = vpop.f32.mrb[0].mxu0
        %1273 = vmatprep.mubr.bf16.mxu0 0
        %1274 = vmatmul.mubr.bf16.gmra.mrb[0].mxu0 %v934
        %v1275 = vpop.f32.mrb[0].mxu0
        %v1276 = vadd.f32 %v1187, %v1275
        %v1277 = vpop.f32.mrb[0].mxu0
        %v1278 = vpop.f32.mrb[0].mxu0
        %v1279 = vadd.f32 %v1190, %v1278
        %v1280 = vpop.f32.mrb[0].mxu0
        %1281 = vmatprep.mubr.bf16.mxu0 0
        %1282 = vmatmul.mubr.bf16.gmra.mrb[0].mxu0 %v937
        %v1283 = vpop.f32.mrb[0].mxu0
        %v1284 = vadd.f32 %v1195, %v1283
        %v1285 = vpop.f32.mrb[0].mxu0
        %v1286 = vpop.f32.mrb[0].mxu0
        %v1287 = vadd.f32 %v1198, %v1286
        %v1288 = vpop.f32.mrb[0].mxu0
        %1289 = vmatprep.mubr.bf16.mxu0 0
        %1290 = vmatmul.mubr.bf16.gmra.mrb[0].mxu0 %v940
        %v1291 = vpop.f32.mrb[0].mxu0
        %v1292 = vadd.f32 %v1203, %v1291
        %v1293 = vpop.f32.mrb[0].mxu0
        %v1294 = vpop.f32.mrb[0].mxu0
        %v1295 = vadd.f32 %v1206, %v1294
        %v1296 = vpop.f32.mrb[0].mxu0
        %1297 = vdwg.mxu0
        %vm1298 = vcmask 80896
        %1299 = vst.msk [vmem:[%s207] sm:$0xff] %vm1298, %v1244
        %1300 = vst.msk [vmem:[%s207 + $0x8] sm:$0xff] %vm1298, %v1247
        %1301 = vst.msk [vmem:[%s207 + $0x10] sm:$0xff] %vm1298, %v1252
        %1302 = vst.msk [vmem:[%s207 + $0x18] sm:$0xff] %vm1298, %v1255
        %1303 = vst.msk [vmem:[%s207 + $0x20] sm:$0xff] %vm1298, %v1260
        %1304 = vst.msk [vmem:[%s207 + $0x28] sm:$0xff] %vm1298, %v1263
        %1305 = vst.msk [vmem:[%s207 + $0x30] sm:$0xff] %vm1298, %v1268
        %1306 = vst.msk [vmem:[%s207 + $0x38] sm:$0xff] %vm1298, %v1271
        %1307 = vst.msk [vmem:[%s207 + $0x40] sm:$0xff] %vm1298, %v1276
        %1308 = vst.msk [vmem:[%s207 + $0x48] sm:$0xff] %vm1298, %v1279
        %1309 = vst.msk [vmem:[%s207 + $0x50] sm:$0xff] %vm1298, %v1284
        %1310 = vst.msk [vmem:[%s207 + $0x58] sm:$0xff] %vm1298, %v1287
        %1311 = vst.msk [vmem:[%s207 + $0x60] sm:$0xff] %vm1298, %v1292
        %1312 = vst.msk [vmem:[%s207 + $0x68] sm:$0xff] %vm1298, %v1295
        %s1313 = sand.u32 %s94, 1
        %s1314 = sand.u32 %s94, 1
        %s1315 = smul.addr %s1314, 112
        %s1316 = scalar_lea.vmem [#allocation6], %s1315
        // Predicated region
        $region41: #{tpu_custom_call.1} parent=31 // pred_check
          %p1317 = pneg %p104
        $region42: #{tpu_custom_call.1} parent=31 // pred_check_branch
          %1319 = sbr.rel (%p1317) target = $region44
        $region43: #{tpu_custom_call.1} parent=31 // pred_region
          %s1320 = smul.u32 14, %s18
          %s1321 = ssub.s32 25, %s1320
          %p1322 = scmp.lt.s32.totalorder %s1321, 14
          %s1323 = scalar_select %p1322, %s1321, 14
          %s1324 = smul.u32 128, %s1323
          %p1325 = scmp.ne.s32.totalorder 0, %s1324
          %s1326 = smul.addr %s1320, 8
          %s1327 = scalar_lea.vmem %s3, %s1326
          // Predicated region
          $region45: #{tpu_custom_call.1} parent=43 // pred_check
            %p1328 = pneg %p1325
          $region46: #{tpu_custom_call.1} parent=43 // pred_check_branch
            %1330 = sbr.rel (%p1328) target = $region48
          $region47: #{tpu_custom_call.1} parent=43 // pred_region
            // Predicated region
            $region49: #{tpu_custom_call.1} parent=47 // pred_check
              _
            $region50: #{tpu_custom_call.1} parent=47 // pred_check_branch
              %1332 = sbr.rel (0) target = $region52
            $region51: #{tpu_custom_call.1} parent=47 // pred_region
              // Predicated region
              $region71: #{tpu_custom_call.1} parent=51 // pred_check
                _
              $region72: #{tpu_custom_call.1} parent=51 // pred_check_branch
                %1408 = sbr.rel (0) target = $region74
              $region73: #{tpu_custom_call.1} parent=51 // pred_region
                %s1409 = sdiv.u32.pop %s1323, 14
                %s1410 = srem.u32.pop %s1323, 14
                // While loop
                $region75: #{tpu_custom_call.1} parent=73 // loop_pre_header
                  _
                $region76: #{tpu_custom_call.1} parent=73 // loop_header
                  %s1412 = sphi 0, %s1414
                  %p1413 = scmp.ge.s32.totalorder %s1412, %s1409
                  %s1417 = sphi 0, %s1450
                  %s1418 = sphi %s1316, %s1453
                  %s1419 = sphi %s1327, %s1454
                $region77: #{tpu_custom_call.1} parent=73 // loop_header_branch
                  %1416 = sbr.rel (%p1413) target = $region81
                $region78: #{tpu_custom_call.1} parent=73 // loop_body
                  %v1420 = vld [vmem:[%s1418] sm:$0xff]
                  %1421 = vst [vmem:[%s1419] sm:$0xff] %v1420
                  %v1422 = vld [vmem:[%s1418 + $0x8] sm:$0xff]
                  %1423 = vst [vmem:[%s1419 + $0x8] sm:$0xff] %v1422
                  %v1424 = vld [vmem:[%s1418 + $0x10] sm:$0xff]
                  %1425 = vst [vmem:[%s1419 + $0x10] sm:$0xff] %v1424
                  %v1426 = vld [vmem:[%s1418 + $0x18] sm:$0xff]
                  %1427 = vst [vmem:[%s1419 + $0x18] sm:$0xff] %v1426
                  %v1428 = vld [vmem:[%s1418 + $0x20] sm:$0xff]
                  %1429 = vst [vmem:[%s1419 + $0x20] sm:$0xff] %v1428
                  %v1430 = vld [vmem:[%s1418 + $0x28] sm:$0xff]
                  %1431 = vst [vmem:[%s1419 + $0x28] sm:$0xff] %v1430
                  %v1432 = vld [vmem:[%s1418 + $0x30] sm:$0xff]
                  %1433 = vst [vmem:[%s1419 + $0x30] sm:$0xff] %v1432
                  %v1434 = vld [vmem:[%s1418 + $0x38] sm:$0xff]
                  %1435 = vst [vmem:[%s1419 + $0x38] sm:$0xff] %v1434
                  %v1436 = vld [vmem:[%s1418 + $0x40] sm:$0xff]
                  %1437 = vst [vmem:[%s1419 + $0x40] sm:$0xff] %v1436
                  %v1438 = vld [vmem:[%s1418 + $0x48] sm:$0xff]
                  %1439 = vst [vmem:[%s1419 + $0x48] sm:$0xff] %v1438
                  %v1440 = vld [vmem:[%s1418 + $0x50] sm:$0xff]
                  %1441 = vst [vmem:[%s1419 + $0x50] sm:$0xff] %v1440
                  %v1442 = vld [vmem:[%s1418 + $0x58] sm:$0xff]
                  %1443 = vst [vmem:[%s1419 + $0x58] sm:$0xff] %v1442
                  %v1444 = vld [vmem:[%s1418 + $0x60] sm:$0xff]
                  %1445 = vst [vmem:[%s1419 + $0x60] sm:$0xff] %v1444
                  %v1446 = vld [vmem:[%s1418 + $0x68] sm:$0xff]
                  %1447 = vst [vmem:[%s1419 + $0x68] sm:$0xff] %v1446
                  %s1448 = sadd.s32 1, %s1417
                  %p1449 = scmp.ge.s32.totalorder %s1448, %s1409
                  %s1450 = scalar_select %p1449, 0, %s1448
                  %s1451 = smul.u32 %s1450, 112
                  %s1452 = smul.u32 %s1450, 112
                  %s1453 = scalar_lea.vmem %s1316, %s1451 [#allocation6]
                  %s1454 = scalar_lea.vmem %s1327, %s1452
                $region79: #{tpu_custom_call.1} parent=73 // loop_footer
                  %s1414 = sadd.s32 %s1412, 1
                $region80: #{tpu_custom_call.1} parent=73 // loop_footer_branch
                  %1411 = sbr.rel target = $region76
                $region81: #{tpu_custom_call.1} parent=73 // loop_exit
                  _
                %s1455 = sdiv.u32.pop %s1323, 14
                %s1456 = srem.u32.pop %s1323, 14
                %s1457 = smul.u32 %s1455, 14
                %s1458 = smul.u32 8, %s1457
                %s1459 = scalar_lea.vmem %s1316, %s1458 [#allocation6]
                %s1460 = smul.u32 8, %s1457
                %s1461 = scalar_lea.vmem %s1327, %s1460
                // While loop
                $region82: #{tpu_custom_call.1} parent=73 // loop_pre_header
                  _
                $region83: #{tpu_custom_call.1} parent=73 // loop_header
                  %s1463 = sphi 0, %s1465
                  %p1464 = scmp.ge.s32.totalorder %s1463, %s1456
                  %s1468 = sphi 0, %s1475
                  %s1469 = sphi %s1459, %s1478
                  %s1470 = sphi %s1461, %s1479
                $region84: #{tpu_custom_call.1} parent=73 // loop_header_branch
                  %1467 = sbr.rel (%p1464) target = $region88
                $region85: #{tpu_custom_call.1} parent=73 // loop_body
                  %v1471 = vld [vmem:[%s1469] sm:$0xff]
                  %1472 = vst [vmem:[%s1470] sm:$0xff] %v1471
                  %s1473 = sadd.s32 1, %s1468
                  %p1474 = scmp.ge.s32.totalorder %s1473, %s1456
                  %s1475 = scalar_select %p1474, 0, %s1473
                  %s1476 = smul.u32 %s1475, 8
                  %s1477 = smul.u32 %s1475, 8
                  %s1478 = scalar_lea.vmem %s1459, %s1476 [#allocation6]
                  %s1479 = scalar_lea.vmem %s1461, %s1477
                $region86: #{tpu_custom_call.1} parent=73 // loop_footer
                  %s1465 = sadd.s32 %s1463, 1
                $region87: #{tpu_custom_call.1} parent=73 // loop_footer_branch
                  %1462 = sbr.rel target = $region83
                $region88: #{tpu_custom_call.1} parent=73 // loop_exit
                  _
              $region74: #{tpu_custom_call.1} parent=51 // pred_fallthru
                _
              // Predicated region
              $region89: #{tpu_custom_call.1} parent=51 // pred_check
                _
              $region90: #{tpu_custom_call.1} parent=51 // pred_check_branch
                %1481 = sbr.rel target = $region92
              $region91: #{tpu_custom_call.1} parent=51 // pred_region
                _
              $region92: #{tpu_custom_call.1} parent=51 // pred_fallthru
                _
            $region52: #{tpu_custom_call.1} parent=47 // pred_fallthru
              _
            // Predicated region
            $region53: #{tpu_custom_call.1} parent=47 // pred_check
              _
            $region54: #{tpu_custom_call.1} parent=47 // pred_check_branch
              %1334 = sbr.rel target = $region56
            $region55: #{tpu_custom_call.1} parent=47 // pred_region
              %s1336 = sdiv.u32.pop %s1323, 14
              %s1337 = srem.u32.pop %s1323, 14
              // While loop
              $region57: #{tpu_custom_call.1} parent=55 // loop_pre_header
                _
              $region58: #{tpu_custom_call.1} parent=55 // loop_header
                %s1339 = sphi 0, %s1341
                %p1340 = scmp.ge.s32.totalorder %s1339, %s1336
                %s1344 = sphi 0, %s1377
                %s1345 = sphi %s1316, %s1380
                %s1346 = sphi %s1327, %s1381
              $region59: #{tpu_custom_call.1} parent=55 // loop_header_branch
                %1343 = sbr.rel (%p1340) target = $region63
              $region60: #{tpu_custom_call.1} parent=55 // loop_body
                %v1347 = vld [vmem:[%s1345] sm:$0xff]
                %1348 = vst [vmem:[%s1346] sm:$0xff] %v1347
                %v1349 = vld [vmem:[%s1345 + $0x8] sm:$0xff]
                %1350 = vst [vmem:[%s1346 + $0x8] sm:$0xff] %v1349
                %v1351 = vld [vmem:[%s1345 + $0x10] sm:$0xff]
                %1352 = vst [vmem:[%s1346 + $0x10] sm:$0xff] %v1351
                %v1353 = vld [vmem:[%s1345 + $0x18] sm:$0xff]
                %1354 = vst [vmem:[%s1346 + $0x18] sm:$0xff] %v1353
                %v1355 = vld [vmem:[%s1345 + $0x20] sm:$0xff]
                %1356 = vst [vmem:[%s1346 + $0x20] sm:$0xff] %v1355
                %v1357 = vld [vmem:[%s1345 + $0x28] sm:$0xff]
                %1358 = vst [vmem:[%s1346 + $0x28] sm:$0xff] %v1357
                %v1359 = vld [vmem:[%s1345 + $0x30] sm:$0xff]
                %1360 = vst [vmem:[%s1346 + $0x30] sm:$0xff] %v1359
                %v1361 = vld [vmem:[%s1345 + $0x38] sm:$0xff]
                %1362 = vst [vmem:[%s1346 + $0x38] sm:$0xff] %v1361
                %v1363 = vld [vmem:[%s1345 + $0x40] sm:$0xff]
                %1364 = vst [vmem:[%s1346 + $0x40] sm:$0xff] %v1363
                %v1365 = vld [vmem:[%s1345 + $0x48] sm:$0xff]
                %1366 = vst [vmem:[%s1346 + $0x48] sm:$0xff] %v1365
                %v1367 = vld [vmem:[%s1345 + $0x50] sm:$0xff]
                %1368 = vst [vmem:[%s1346 + $0x50] sm:$0xff] %v1367
                %v1369 = vld [vmem:[%s1345 + $0x58] sm:$0xff]
                %1370 = vst [vmem:[%s1346 + $0x58] sm:$0xff] %v1369
                %v1371 = vld [vmem:[%s1345 + $0x60] sm:$0xff]
                %1372 = vst [vmem:[%s1346 + $0x60] sm:$0xff] %v1371
                %v1373 = vld [vmem:[%s1345 + $0x68] sm:$0xff]
                %1374 = vst [vmem:[%s1346 + $0x68] sm:$0xff] %v1373
                %s1375 = sadd.s32 1, %s1344
                %p1376 = scmp.ge.s32.totalorder %s1375, %s1336
                %s1377 = scalar_select %p1376, 0, %s1375
                %s1378 = smul.u32 %s1377, 112
                %s1379 = smul.u32 %s1377, 112
                %s1380 = scalar_lea.vmem %s1316, %s1378 [#allocation6]
                %s1381 = scalar_lea.vmem %s1327, %s1379
              $region61: #{tpu_custom_call.1} parent=55 // loop_footer
                %s1341 = sadd.s32 %s1339, 1
              $region62: #{tpu_custom_call.1} parent=55 // loop_footer_branch
                %1338 = sbr.rel target = $region58
              $region63: #{tpu_custom_call.1} parent=55 // loop_exit
                _
              %s1382 = sdiv.u32.pop %s1323, 14
              %s1383 = srem.u32.pop %s1323, 14
              %s1384 = smul.u32 %s1382, 14
              %s1385 = smul.u32 8, %s1384
              %s1386 = scalar_lea.vmem %s1316, %s1385 [#allocation6]
              %s1387 = smul.u32 8, %s1384
              %s1388 = scalar_lea.vmem %s1327, %s1387
              // While loop
              $region64: #{tpu_custom_call.1} parent=55 // loop_pre_header
                _
              $region65: #{tpu_custom_call.1} parent=55 // loop_header
                %s1390 = sphi 0, %s1392
                %p1391 = scmp.ge.s32.totalorder %s1390, %s1383
                %s1395 = sphi 0, %s1402
                %s1396 = sphi %s1386, %s1405
                %s1397 = sphi %s1388, %s1406
              $region66: #{tpu_custom_call.1} parent=55 // loop_header_branch
                %1394 = sbr.rel (%p1391) target = $region70
              $region67: #{tpu_custom_call.1} parent=55 // loop_body
                %v1398 = vld [vmem:[%s1396] sm:$0xff]
                %1399 = vst [vmem:[%s1397] sm:$0xff] %v1398
                %s1400 = sadd.s32 1, %s1395
                %p1401 = scmp.ge.s32.totalorder %s1400, %s1383
                %s1402 = scalar_select %p1401, 0, %s1400
                %s1403 = smul.u32 %s1402, 8
                %s1404 = smul.u32 %s1402, 8
                %s1405 = scalar_lea.vmem %s1386, %s1403 [#allocation6]
                %s1406 = scalar_lea.vmem %s1388, %s1404
              $region68: #{tpu_custom_call.1} parent=55 // loop_footer
                %s1392 = sadd.s32 %s1390, 1
              $region69: #{tpu_custom_call.1} parent=55 // loop_footer_branch
                %1389 = sbr.rel target = $region65
              $region70: #{tpu_custom_call.1} parent=55 // loop_exit
                _
            $region56: #{tpu_custom_call.1} parent=47 // pred_fallthru
              _
          $region48: #{tpu_custom_call.1} parent=43 // pred_fallthru
            _
          %1482 = vnop
        $region44: #{tpu_custom_call.1} parent=31 // pred_fallthru
          _
      $region32: #{tpu_custom_call.1} parent=5 // pred_fallthru
        _
      %p1483 = scmp.le.s32.totalorder 2, %s13
      // Predicated region
      $region93: #{tpu_custom_call.1} parent=5 // pred_check
        %p1484 = pneg %p1483
      $region94: #{tpu_custom_call.1} parent=5 // pred_check_branch
        %1486 = sbr.rel (%p1484) target = $region96
      $region95: #{tpu_custom_call.1} parent=5 // pred_region
        %s1487 = ssub.s32 %s13, 2
        // Predicated region
        $region97: #{tpu_custom_call.1} parent=95 // pred_check
          %p1488 = pneg %p110
        $region98: #{tpu_custom_call.1} parent=95 // pred_check_branch
          %1490 = sbr.rel (%p1488) target = $region100
        $region99: #{tpu_custom_call.1} parent=95 // pred_region
          %s1491 = sand.u32 %s95, 1
          %s1492 = sand.u32 %s95, 1
          %s1493 = smul.addr %s1492, 112
          %s1494 = scalar_lea.vmem [#allocation6], %s1493
        $region100: #{tpu_custom_call.1} parent=95 // pred_fallthru
          _
      $region96: #{tpu_custom_call.1} parent=5 // pred_fallthru
        _
    $region6: #{tpu_custom_call.1} parent=1 // loop_footer
      %s17 = sadd.s32 1, %s13
    $region7: #{tpu_custom_call.1} parent=1 // loop_footer_branch
      %12 = sbr.rel target = $region3
    $region8: #{tpu_custom_call.1} parent=1 // loop_exit
      _
    %1495 = vsyncpa [#allocation3], 1
    %s1496 = scalar_lea.sflag [#allocation3], 1
    %1497 = vsyncpa %s1496, 1
    %1498 = vsyncpa [#allocation5], 1

</llo_original>
